<compile_context>
chip_gen: v5e
topology: v5e:2x2
jax: 0.10.0
libtpu: 0.0.40
codegen_flags: <defaults>
</compile_context>

<pallas_src>
import functools

import jax
import jax.numpy as jnp
from jax.experimental import pallas as pl
from jax.experimental.pallas import tpu as pltpu


LATENT_DIM = 16
LAYER_SIZES = [64, 128, 256, 128, 64]                          # hparams['layer_sizes']
HIDDEN_DIMS = [LATENT_DIM] + list(reversed(LAYER_SIZES))       # [16, 64, 128, 256, 128, 64]
EMBEDDING_SIZES = [(7, 16), (2, 16)]
CONT_VARS = ['value', 'hour_min', 'gap_holiday', 't']
OUT_DIM = sum(e for _, e in EMBEDDING_SIZES) + len(CONT_VARS)  # 36
BN_EPS = 1e-5
LEAKY_SLOPE = 0.1

LANE = 128


def _round_up(x, m):
    return ((x + m - 1) // m) * m


# Padded widths for the *intermediate* activations only (inputs of layers 1..4
# and of the reconstruction Linear).  The latent (16) and output (36) edges
# stay unpadded because they touch HBM.
PADDED_HID = [_round_up(d, LANE) for d in HIDDEN_DIMS]         # [128,128,128,256,128,128]


def decoder_kernel(z_ref,
                   w0_ref, t0_ref,
                   w1_ref, t1_ref,
                   w2_ref, t2_ref,
                   w3_ref, t3_ref,
                   w4_ref, t4_ref,
                   wr_ref, br_ref,
                   out_ref):
    """One batch tile of the whole decoder. Weights stay VMEM-resident."""
    compute_dtype = w0_ref.dtype

    def layer(h, w_ref, t_ref):
        # Linear with folded BN scale (MXU, bf16 inputs / f32 accumulation),
        # folded shift (bias+BN) and LeakyReLU(0.1) on the VPU in f32.
        acc = jnp.dot(h.astype(compute_dtype), w_ref[...],
                      preferred_element_type=jnp.float32)
        acc = acc + t_ref[...]
        return jnp.maximum(acc, LEAKY_SLOPE * acc)   # LeakyReLU, 0 < slope < 1

    h = z_ref[...].astype(jnp.float32)
    h = layer(h, w0_ref, t0_ref)
    h = layer(h, w1_ref, t1_ref)
    h = layer(h, w2_ref, t2_ref)
    h = layer(h, w3_ref, t3_ref)
    h = layer(h, w4_ref, t4_ref)
    # Final reconstruction Linear (no BN / activation), unpadded 36-wide output.
    recon = jnp.dot(h.astype(compute_dtype), wr_ref[...],
                    preferred_element_type=jnp.float32) + br_ref[...]
    out_ref[...] = recon.astype(out_ref.dtype)


def init_params(key):
    """Deterministic synthetic parameters with PyTorch-equivalent shapes."""
    params = {'layers': [], 'recon': None}
    for i in range(len(HIDDEN_DIMS) - 1):
        in_d, out_d = HIDDEN_DIMS[i], HIDDEN_DIMS[i + 1]
        key, kw, kb, kg, kbe, km, kv = jax.random.split(key, 7)
        bound = 1.0 / (in_d ** 0.5)
        w = jax.random.uniform(kw, (in_d, out_d), jnp.float32, -bound, bound)   # Linear.weight^T
        b = jax.random.uniform(kb, (out_d,), jnp.float32, -bound, bound)        # Linear.bias
        gamma = 1.0 + 0.1 * jax.random.normal(kg, (out_d,), jnp.float32)        # BN.weight
        beta = 0.1 * jax.random.normal(kbe, (out_d,), jnp.float32)              # BN.bias
        run_mean = 0.05 * jax.random.normal(km, (out_d,), jnp.float32)          # BN.running_mean
        run_var = 1.0 + 0.1 * jax.random.uniform(kv, (out_d,), jnp.float32)     # BN.running_var
        params['layers'].append((w, b, gamma, beta, run_mean, run_var))
    in_d, out_d = HIDDEN_DIMS[-1], OUT_DIM
    key, kw, kb = jax.random.split(key, 3)
    bound = 1.0 / (in_d ** 0.5)
    wr = jax.random.uniform(kw, (in_d, out_d), jnp.float32, -bound, bound)
    br = jax.random.uniform(kb, (out_d,), jnp.float32, -bound, bound)
    params['recon'] = (wr, br)
    return params


def _fold_and_pad_params(params, compute_dtype):
    """Fold BN(eval)+bias into (W*scale, shift); pad only intermediate widths."""
    folded = []
    for i, (w, b, gamma, beta, run_mean, run_var) in enumerate(params['layers']):
        scale = gamma / jnp.sqrt(run_var + BN_EPS)
        shift = (b - run_mean) * scale + beta
        w_folded = (w * scale[None, :]).astype(compute_dtype)
        # Layer 0 keeps its real input width (16); later layers consume the
        # 128/256-padded intermediates.  Outputs of all hidden layers padded.
        in_pad = HIDDEN_DIMS[i] if i == 0 else PADDED_HID[i]
        out_pad = PADDED_HID[i + 1]
        w_p = jnp.zeros((in_pad, out_pad), compute_dtype)
        w_p = w_p.at[:w.shape[0], :w.shape[1]].set(w_folded)
        t_p = jnp.zeros((1, out_pad), jnp.float32)
        t_p = t_p.at[0, :shift.shape[0]].set(shift)
        folded += [w_p, t_p]

    wr, br = params['recon']
    # Reconstruction Linear: padded input rows (128), UNPADDED output (36).
    wr_p = jnp.zeros((PADDED_HID[-1], OUT_DIM), compute_dtype)
    wr_p = wr_p.at[:wr.shape[0], :].set(wr.astype(compute_dtype))
    br_p = br.reshape(1, OUT_DIM).astype(jnp.float32)
    folded += [wr_p, br_p]
    return folded


@functools.partial(jax.jit, static_argnames=("tile_b",))
def decoder_forward(z, params, *, tile_b=2048):
    """Fold params in plain JAX, run the batch-gridded Pallas kernel."""
    compute_dtype = jnp.bfloat16
    B = z.shape[0]

    # Batch tiling: multiple of 8 sublanes, capped by requested tile size.
    # Aim for a grid of >= 2 steps so the "parallel" batch axis can be split
    # across v7x's two TensorCores (no-op on v5e/v6e).
    half = _round_up(max(-(-B // 2), 8), 8)
    tb = min(_round_up(tile_b, 8), half)
    b_pad = _round_up(B, tb)
    grid = (b_pad // tb,)

    # No latent-dim padding: z stays (B, 16).  Only pad the batch dim if the
    # tile does not divide it.
    z_in = z.astype(jnp.float32)
    if b_pad != B:
        z_in = jnp.pad(z_in, ((0, b_pad - B), (0, 0)))

    weight_args = _fold_and_pad_params(params, compute_dtype)

    # z / out: tiled over batch.  Weights & shifts: constant index map ->
    # fetched once, VMEM-resident across all grid steps (~210 KB bf16).
    in_specs = [pl.BlockSpec((tb, LATENT_DIM), lambda i: (i, 0))]
    in_specs += [pl.BlockSpec(w.shape, lambda i: (0, 0)) for w in weight_args]
    out_specs = pl.BlockSpec((tb, OUT_DIM), lambda i: (i, 0))

    # Advisory cost estimate: 2*M*K*N per matmul (padded dims), streamed bytes.
    kn_pairs = []
    for i in range(len(HIDDEN_DIMS) - 1):
        k = HIDDEN_DIMS[i] if i == 0 else PADDED_HID[i]
        kn_pairs.append((k, PADDED_HID[i + 1]))
    kn_pairs.append((PADDED_HID[-1], OUT_DIM))
    flops = 2 * b_pad * sum(k * n for k, n in kn_pairs)
    weight_bytes = sum(int(w.size) * w.dtype.itemsize for w in weight_args)
    bytes_accessed = b_pad * (LATENT_DIM * 4 + OUT_DIM * 4) + weight_bytes
    cost = pl.CostEstimate(flops=int(flops), transcendentals=0,
                           bytes_accessed=int(bytes_accessed))

    out_p = pl.pallas_call(
        decoder_kernel,
        out_shape=jax.ShapeDtypeStruct((b_pad, OUT_DIM), jnp.float32),
        grid=grid,
        in_specs=in_specs,
        out_specs=out_specs,
        compiler_params=pltpu.CompilerParams(
            dimension_semantics=("parallel",),
        ),
        cost_estimate=cost,
    )(z_in, *weight_args)

    return out_p if b_pad == B else out_p[:B]


def decoder_forward_ref(z, params):
    """Pure-JAX f32 reference of the PyTorch forward (BN in eval mode)."""
    h = z
    for (w, b, gamma, beta, run_mean, run_var) in params['layers']:
        h = h @ w + b
        h = (h - run_mean) / jnp.sqrt(run_var + BN_EPS) * gamma + beta
        h = jnp.where(h > 0, h, LEAKY_SLOPE * h)
    wr, br = params['recon']
    return h @ wr + br


def decoder_forward_ref_folded_bf16(z, params):
    """Same fold + bf16 matmul precision as the kernel (tight numerical check)."""
    h = z.astype(jnp.float32)
    for (w, b, gamma, beta, run_mean, run_var) in params['layers']:
        scale = gamma / jnp.sqrt(run_var + BN_EPS)
        shift = (b - run_mean) * scale + beta
        wf = (w * scale[None, :]).astype(jnp.bfloat16)
        h = jnp.dot(h.astype(jnp.bfloat16), wf,
                    preferred_element_type=jnp.float32) + shift
        h = jnp.where(h > 0, h, LEAKY_SLOPE * h)
    wr, br = params['recon']
    return jnp.dot(h.astype(jnp.bfloat16), wr.astype(jnp.bfloat16),
                   preferred_element_type=jnp.float32) + br


if __name__ == "__main__":
    key = jax.random.PRNGKey(0)
    key, kz, kp = jax.random.split(key, 3)

    B = 8
    z = jax.random.normal(kz, (B, LATENT_DIM), jnp.float32)
    params = init_params(kp)

    out = decoder_forward(z, params)
    out = jax.block_until_ready(out)
    assert out.shape == (B, OUT_DIM), out.shape

    # Tight check against a same-precision (bf16-matmul, folded) reference.
    ref_bf16 = decoder_forward_ref_folded_bf16(z, params)
    assert jnp.allclose(out, ref_bf16, atol=1e-2, rtol=1e-2), \
        float(jnp.max(jnp.abs(out - ref_bf16)))

    # Loose check against the exact f32 PyTorch-semantics forward.
    ref_f32 = decoder_forward_ref(z, params)
    assert jnp.allclose(out, ref_f32, atol=1e-1, rtol=1e-1), \
        float(jnp.max(jnp.abs(out - ref_f32)))

    # Also exercise a non-trivial grid (batch > one tile, odd remainder).
    B2 = 300
    z2 = jax.random.normal(kz, (B2, LATENT_DIM), jnp.float32)
    out2 = jax.block_until_ready(decoder_forward(z2, params))
    assert out2.shape == (B2, OUT_DIM), out2.shape
    ref2 = decoder_forward_ref_folded_bf16(z2, params)
    assert jnp.allclose(out2, ref2, atol=1e-2, rtol=1e-2), \
        float(jnp.max(jnp.abs(out2 - ref2)))

    print("KERNEL_OK")
</pallas_src>

<mosaic_0001>
module attributes {stable_mosaic.version = 11 : i64} {
  func.func @decoder_kernel(%arg0: i32, %arg1: memref<8x16xf32, #tpu.memory_space<vmem>>, %arg2: memref<16x128xbf16, #tpu.memory_space<vmem>>, %arg3: memref<1x128xf32, #tpu.memory_space<vmem>>, %arg4: memref<128x128xbf16, #tpu.memory_space<vmem>>, %arg5: memref<1x128xf32, #tpu.memory_space<vmem>>, %arg6: memref<128x256xbf16, #tpu.memory_space<vmem>>, %arg7: memref<1x256xf32, #tpu.memory_space<vmem>>, %arg8: memref<256x128xbf16, #tpu.memory_space<vmem>>, %arg9: memref<1x128xf32, #tpu.memory_space<vmem>>, %arg10: memref<128x128xbf16, #tpu.memory_space<vmem>>, %arg11: memref<1x128xf32, #tpu.memory_space<vmem>>, %arg12: memref<128x36xbf16, #tpu.memory_space<vmem>>, %arg13: memref<1x36xf32, #tpu.memory_space<vmem>>, %arg14: memref<8x36xf32, #tpu.memory_space<vmem>>) attributes {dimension_semantics = [#tpu.dimension_semantics<parallel>], iteration_bounds = array<i64: 1>, scalar_prefetch = 0 : i64, scratch_operands = 0 : i64, tpu.core_type = #tpu.core_type<tc>, window_params = [{transform_indices = @transform_0, window_bounds = array<i64: 8, 16>}, {pipeline_mode = #tpu.pipeline_mode<synchronous>, transform_indices = @transform_1, window_bounds = array<i64: 16, 128>}, {pipeline_mode = #tpu.pipeline_mode<synchronous>, transform_indices = @transform_2, window_bounds = array<i64: 1, 128>}, {pipeline_mode = #tpu.pipeline_mode<synchronous>, transform_indices = @transform_3, window_bounds = array<i64: 128, 128>}, {pipeline_mode = #tpu.pipeline_mode<synchronous>, transform_indices = @transform_4, window_bounds = array<i64: 1, 128>}, {pipeline_mode = #tpu.pipeline_mode<synchronous>, transform_indices = @transform_5, window_bounds = array<i64: 128, 256>}, {pipeline_mode = #tpu.pipeline_mode<synchronous>, transform_indices = @transform_6, window_bounds = array<i64: 1, 256>}, {pipeline_mode = #tpu.pipeline_mode<synchronous>, transform_indices = @transform_7, window_bounds = array<i64: 256, 128>}, {pipeline_mode = #tpu.pipeline_mode<synchronous>, transform_indices = @transform_8, window_bounds = array<i64: 1, 128>}, {pipeline_mode = #tpu.pipeline_mode<synchronous>, transform_indices = @transform_9, window_bounds = array<i64: 128, 128>}, {pipeline_mode = #tpu.pipeline_mode<synchronous>, transform_indices = @transform_10, window_bounds = array<i64: 1, 128>}, {pipeline_mode = #tpu.pipeline_mode<synchronous>, transform_indices = @transform_11, window_bounds = array<i64: 128, 36>}, {pipeline_mode = #tpu.pipeline_mode<synchronous>, transform_indices = @transform_12, window_bounds = array<i64: 1, 36>}, {transform_indices = @transform_13, window_bounds = array<i64: 8, 36>}]} {
    %c0 = arith.constant 0 : index
    %c0_0 = arith.constant 0 : index
    %0 = vector.load %arg1[%c0, %c0_0] : memref<8x16xf32, #tpu.memory_space<vmem>>, vector<8x16xf32>
    %1 = arith.truncf %0 : vector<8x16xf32> to vector<8x16xbf16>
    %c0_1 = arith.constant 0 : index
    %c0_2 = arith.constant 0 : index
    %2 = vector.load %arg2[%c0_1, %c0_2] : memref<16x128xbf16, #tpu.memory_space<vmem>>, vector<16x128xbf16>
    %cst = arith.constant dense<0.000000e+00> : vector<8x128xf32>
    %3 = tpu.matmul %1, %2, %cst {dimension_numbers = #tpu.dot_dimension_numbers<[1], [0], [0], [1], [0, 0, 1, 1], [], []>} : vector<8x16xbf16>, vector<16x128xbf16>, vector<8x128xf32> -> vector<8x128xf32>
    %c0_3 = arith.constant 0 : index
    %c0_4 = arith.constant 0 : index
    %4 = vector.load %arg3[%c0_3, %c0_4] : memref<1x128xf32, #tpu.memory_space<vmem>>, vector<1x128xf32>
    %5 = vector.broadcast %4 : vector<1x128xf32> to vector<8x128xf32>
    %6 = arith.addf %3, %5 : vector<8x128xf32>
    %cst_5 = arith.constant 1.000000e-01 : f32
    %7 = vector.broadcast %cst_5 : f32 to vector<8x128xf32>
    %8 = arith.mulf %7, %6 : vector<8x128xf32>
    %9 = arith.maximumf %6, %8 : vector<8x128xf32>
    %10 = arith.truncf %9 : vector<8x128xf32> to vector<8x128xbf16>
    %c0_6 = arith.constant 0 : index
    %c0_7 = arith.constant 0 : index
    %11 = vector.load %arg4[%c0_6, %c0_7] : memref<128x128xbf16, #tpu.memory_space<vmem>>, vector<128x128xbf16>
    %cst_8 = arith.constant dense<0.000000e+00> : vector<8x128xf32>
    %12 = tpu.matmul %10, %11, %cst_8 {dimension_numbers = #tpu.dot_dimension_numbers<[1], [0], [0], [1], [0, 0, 1, 1], [], []>} : vector<8x128xbf16>, vector<128x128xbf16>, vector<8x128xf32> -> vector<8x128xf32>
    %c0_9 = arith.constant 0 : index
    %c0_10 = arith.constant 0 : index
    %13 = vector.load %arg5[%c0_9, %c0_10] : memref<1x128xf32, #tpu.memory_space<vmem>>, vector<1x128xf32>
    %14 = vector.broadcast %13 : vector<1x128xf32> to vector<8x128xf32>
    %15 = arith.addf %12, %14 : vector<8x128xf32>
    %cst_11 = arith.constant 1.000000e-01 : f32
    %16 = vector.broadcast %cst_11 : f32 to vector<8x128xf32>
    %17 = arith.mulf %16, %15 : vector<8x128xf32>
    %18 = arith.maximumf %15, %17 : vector<8x128xf32>
    %19 = arith.truncf %18 : vector<8x128xf32> to vector<8x128xbf16>
    %c0_12 = arith.constant 0 : index
    %c0_13 = arith.constant 0 : index
    %20 = vector.load %arg6[%c0_12, %c0_13] : memref<128x256xbf16, #tpu.memory_space<vmem>>, vector<128x256xbf16>
    %cst_14 = arith.constant dense<0.000000e+00> : vector<8x256xf32>
    %21 = tpu.matmul %19, %20, %cst_14 {dimension_numbers = #tpu.dot_dimension_numbers<[1], [0], [0], [1], [0, 0, 1, 1], [], []>} : vector<8x128xbf16>, vector<128x256xbf16>, vector<8x256xf32> -> vector<8x256xf32>
    %c0_15 = arith.constant 0 : index
    %c0_16 = arith.constant 0 : index
    %22 = vector.load %arg7[%c0_15, %c0_16] : memref<1x256xf32, #tpu.memory_space<vmem>>, vector<1x256xf32>
    %23 = vector.broadcast %22 : vector<1x256xf32> to vector<8x256xf32>
    %24 = arith.addf %21, %23 : vector<8x256xf32>
    %cst_17 = arith.constant 1.000000e-01 : f32
    %25 = vector.broadcast %cst_17 : f32 to vector<8x256xf32>
    %26 = arith.mulf %25, %24 : vector<8x256xf32>
    %27 = arith.maximumf %24, %26 : vector<8x256xf32>
    %28 = arith.truncf %27 : vector<8x256xf32> to vector<8x256xbf16>
    %c0_18 = arith.constant 0 : index
    %c0_19 = arith.constant 0 : index
    %29 = vector.load %arg8[%c0_18, %c0_19] : memref<256x128xbf16, #tpu.memory_space<vmem>>, vector<256x128xbf16>
    %cst_20 = arith.constant dense<0.000000e+00> : vector<8x128xf32>
    %30 = tpu.matmul %28, %29, %cst_20 {dimension_numbers = #tpu.dot_dimension_numbers<[1], [0], [0], [1], [0, 0, 1, 1], [], []>} : vector<8x256xbf16>, vector<256x128xbf16>, vector<8x128xf32> -> vector<8x128xf32>
    %c0_21 = arith.constant 0 : index
    %c0_22 = arith.constant 0 : index
    %31 = vector.load %arg9[%c0_21, %c0_22] : memref<1x128xf32, #tpu.memory_space<vmem>>, vector<1x128xf32>
    %32 = vector.broadcast %31 : vector<1x128xf32> to vector<8x128xf32>
    %33 = arith.addf %30, %32 : vector<8x128xf32>
    %cst_23 = arith.constant 1.000000e-01 : f32
    %34 = vector.broadcast %cst_23 : f32 to vector<8x128xf32>
    %35 = arith.mulf %34, %33 : vector<8x128xf32>
    %36 = arith.maximumf %33, %35 : vector<8x128xf32>
    %37 = arith.truncf %36 : vector<8x128xf32> to vector<8x128xbf16>
    %c0_24 = arith.constant 0 : index
    %c0_25 = arith.constant 0 : index
    %38 = vector.load %arg10[%c0_24, %c0_25] : memref<128x128xbf16, #tpu.memory_space<vmem>>, vector<128x128xbf16>
    %cst_26 = arith.constant dense<0.000000e+00> : vector<8x128xf32>
    %39 = tpu.matmul %37, %38, %cst_26 {dimension_numbers = #tpu.dot_dimension_numbers<[1], [0], [0], [1], [0, 0, 1, 1], [], []>} : vector<8x128xbf16>, vector<128x128xbf16>, vector<8x128xf32> -> vector<8x128xf32>
    %c0_27 = arith.constant 0 : index
    %c0_28 = arith.constant 0 : index
    %40 = vector.load %arg11[%c0_27, %c0_28] : memref<1x128xf32, #tpu.memory_space<vmem>>, vector<1x128xf32>
    %41 = vector.broadcast %40 : vector<1x128xf32> to vector<8x128xf32>
    %42 = arith.addf %39, %41 : vector<8x128xf32>
    %cst_29 = arith.constant 1.000000e-01 : f32
    %43 = vector.broadcast %cst_29 : f32 to vector<8x128xf32>
    %44 = arith.mulf %43, %42 : vector<8x128xf32>
    %45 = arith.maximumf %42, %44 : vector<8x128xf32>
    %46 = arith.truncf %45 : vector<8x128xf32> to vector<8x128xbf16>
    %c0_30 = arith.constant 0 : index
    %c0_31 = arith.constant 0 : index
    %47 = vector.load %arg12[%c0_30, %c0_31] : memref<128x36xbf16, #tpu.memory_space<vmem>>, vector<128x36xbf16>
    %cst_32 = arith.constant dense<0.000000e+00> : vector<8x36xf32>
    %48 = tpu.matmul %46, %47, %cst_32 {dimension_numbers = #tpu.dot_dimension_numbers<[1], [0], [0], [1], [0, 0, 1, 1], [], []>} : vector<8x128xbf16>, vector<128x36xbf16>, vector<8x36xf32> -> vector<8x36xf32>
    %c0_33 = arith.constant 0 : index
    %c0_34 = arith.constant 0 : index
    %49 = vector.load %arg13[%c0_33, %c0_34] : memref<1x36xf32, #tpu.memory_space<vmem>>, vector<1x36xf32>
    %50 = vector.broadcast %49 : vector<1x36xf32> to vector<8x36xf32>
    %51 = arith.addf %48, %50 : vector<8x36xf32>
    %c0_35 = arith.constant 0 : index
    %c0_36 = arith.constant 0 : index
    %52 = vector.load %arg14[%c0_35, %c0_36] : memref<8x36xf32, #tpu.memory_space<vmem>>, vector<8x36xf32>
    tpu.vector_store %arg14[%c0_35, %c0_36], %51 {strides = array<i32>} : memref<8x36xf32, #tpu.memory_space<vmem>>, vector<8x36xf32>,
    return
  }
  func.func @transform_0(%arg0: i32) -> (i32, i32) {
    %c0_i32 = arith.constant 0 : i32
    %c0_i32_0 = arith.constant 0 : i32
    return %arg0, %c0_i32 : i32, i32
  }
  func.func @transform_1(%arg0: i32) -> (i32, i32) {
    %c0_i32 = arith.constant 0 : i32
    %c0_i32_0 = arith.constant 0 : i32
    %c0_i32_1 = arith.constant 0 : i32
    return %c0_i32, %c0_i32_0 : i32, i32
  }
  func.func @transform_2(%arg0: i32) -> (i32, i32) {
    %c0_i32 = arith.constant 0 : i32
    %c0_i32_0 = arith.constant 0 : i32
    %c0_i32_1 = arith.constant 0 : i32
    return %c0_i32, %c0_i32_0 : i32, i32
  }
  func.func @transform_3(%arg0: i32) -> (i32, i32) {
    %c0_i32 = arith.constant 0 : i32
    %c0_i32_0 = arith.constant 0 : i32
    %c0_i32_1 = arith.constant 0 : i32
    return %c0_i32, %c0_i32_0 : i32, i32
  }
  func.func @transform_4(%arg0: i32) -> (i32, i32) {
    %c0_i32 = arith.constant 0 : i32
    %c0_i32_0 = arith.constant 0 : i32
    %c0_i32_1 = arith.constant 0 : i32
    return %c0_i32, %c0_i32_0 : i32, i32
  }
  func.func @transform_5(%arg0: i32) -> (i32, i32) {
    %c0_i32 = arith.constant 0 : i32
    %c0_i32_0 = arith.constant 0 : i32
    %c0_i32_1 = arith.constant 0 : i32
    return %c0_i32, %c0_i32_0 : i32, i32
  }
  func.func @transform_6(%arg0: i32) -> (i32, i32) {
    %c0_i32 = arith.constant 0 : i32
    %c0_i32_0 = arith.constant 0 : i32
    %c0_i32_1 = arith.constant 0 : i32
    return %c0_i32, %c0_i32_0 : i32, i32
  }
  func.func @transform_7(%arg0: i32) -> (i32, i32) {
    %c0_i32 = arith.constant 0 : i32
    %c0_i32_0 = arith.constant 0 : i32
    %c0_i32_1 = arith.constant 0 : i32
    return %c0_i32, %c0_i32_0 : i32, i32
  }
  func.func @transform_8(%arg0: i32) -> (i32, i32) {
    %c0_i32 = arith.constant 0 : i32
    %c0_i32_0 = arith.constant 0 : i32
    %c0_i32_1 = arith.constant 0 : i32
    return %c0_i32, %c0_i32_0 : i32, i32
  }
  func.func @transform_9(%arg0: i32) -> (i32, i32) {
    %c0_i32 = arith.constant 0 : i32
    %c0_i32_0 = arith.constant 0 : i32
    %c0_i32_1 = arith.constant 0 : i32
    return %c0_i32, %c0_i32_0 : i32, i32
  }
  func.func @transform_10(%arg0: i32) -> (i32, i32) {
    %c0_i32 = arith.constant 0 : i32
    %c0_i32_0 = arith.constant 0 : i32
    %c0_i32_1 = arith.constant 0 : i32
    return %c0_i32, %c0_i32_0 : i32, i32
  }
  func.func @transform_11(%arg0: i32) -> (i32, i32) {
    %c0_i32 = arith.constant 0 : i32
    %c0_i32_0 = arith.constant 0 : i32
    %c0_i32_1 = arith.constant 0 : i32
    return %c0_i32, %c0_i32_0 : i32, i32
  }
  func.func @transform_12(%arg0: i32) -> (i32, i32) {
    %c0_i32 = arith.constant 0 : i32
    %c0_i32_0 = arith.constant 0 : i32
    %c0_i32_1 = arith.constant 0 : i32
    return %c0_i32, %c0_i32_0 : i32, i32
  }
  func.func @transform_13(%arg0: i32) -> (i32, i32) {
    %c0_i32 = arith.constant 0 : i32
    %c0_i32_0 = arith.constant 0 : i32
    return %arg0, %c0_i32 : i32, i32
  }
}

</mosaic_0001>

<llo_original>
// kernel: decoder_forward.1
$region0: #{decoder_forward.1}
  #allocation0 [shape = 'u32[]', space=smem, size = 0x4, offset = 0x4, fixed_abs, tag = 'smem constant byte address 0x4 - core index']
  #allocation1 [shape = 'u32[72,128]{1,0:T(1,128)}', space=vmem, size = 0x9000, scoped, tag = 'internal scratch']
  %s0 = inlined_call_operand.vmem [shape: f32[8,16], index: 0, kind: input, shape index: {}]
  %s1 = inlined_call_operand.vmem [shape: bf16[16,128], index: 1, kind: input, shape index: {}]
  %s2 = inlined_call_operand.vmem [shape: f32[1,128], index: 2, kind: input, shape index: {}]
  %s3 = inlined_call_operand.vmem [shape: bf16[128,128], index: 3, kind: input, shape index: {}]
  %s4 = inlined_call_operand.vmem [shape: f32[1,128], index: 4, kind: input, shape index: {}]
  %s5 = inlined_call_operand.vmem [shape: bf16[128,256], index: 5, kind: input, shape index: {}]
  %s6 = inlined_call_operand.vmem [shape: f32[1,256], index: 6, kind: input, shape index: {}]
  %s7 = inlined_call_operand.vmem [shape: bf16[256,128], index: 7, kind: input, shape index: {}]
  %s8 = inlined_call_operand.vmem [shape: f32[1,128], index: 8, kind: input, shape index: {}]
  %s9 = inlined_call_operand.vmem [shape: bf16[128,128], index: 9, kind: input, shape index: {}]
  %s10 = inlined_call_operand.vmem [shape: f32[1,128], index: 10, kind: input, shape index: {}]
  %s11 = inlined_call_operand.vmem [shape: bf16[128,36], index: 11, kind: input, shape index: {}]
  %s12 = inlined_call_operand.vmem [shape: f32[1,36], index: 12, kind: input, shape index: {}]
  %s13 = inlined_call_operand.hbm [shape: f32[8,36], index: 13, kind: output, shape index: {}]
  %s14 = sld [smem:[#allocation0]]
  $region62: #{decoder_forward.1} parent=0
    _
  %s16 = ssub.s32 1, %s14
  %s17 = scalar_select 0, %s16, %s14
  $region1: #{decoder_forward.1} parent=0
    #allocation2 [shape = 'u8[4096]{0}', space=vmem, size = 0x1000, scoped, tag = 'output window, operand 0, single buffered']
    #allocation3 [shape = 's32[1]{0}', space=sflag, size = 0x4, scoped, tag = 'scoped memory for decoder_forward.1']
    %18 = vsyncpa [#allocation3], 0
    // Predicated region
    $region2: #{decoder_forward.1} parent=1 // pred_check
      _
    $region3: #{decoder_forward.1} parent=1 // pred_check_branch
      %20 = sbr.rel (0) target = $region5
    $region4: #{decoder_forward.1} parent=1 // pred_region
      _
    $region5: #{decoder_forward.1} parent=1 // pred_fallthru
      _
    // Predicated region
    $region6: #{decoder_forward.1} parent=1 // pred_check
      _
    $region7: #{decoder_forward.1} parent=1 // pred_check_branch
      %22 = sbr.rel (0) target = $region9
    $region8: #{decoder_forward.1} parent=1 // pred_region
      _
    $region9: #{decoder_forward.1} parent=1 // pred_fallthru
      _
    // Predicated region
    $region10: #{decoder_forward.1} parent=1 // pred_check
      _
    $region11: #{decoder_forward.1} parent=1 // pred_check_branch
      %24 = sbr.rel (0) target = $region13
    $region12: #{decoder_forward.1} parent=1 // pred_region
      _
    $region13: #{decoder_forward.1} parent=1 // pred_fallthru
      _
    // Predicated region
    $region14: #{decoder_forward.1} parent=1 // pred_check
      _
    $region15: #{decoder_forward.1} parent=1 // pred_check_branch
      %26 = sbr.rel (0) target = $region17
    $region16: #{decoder_forward.1} parent=1 // pred_region
      _
    $region17: #{decoder_forward.1} parent=1 // pred_fallthru
      _
    // Predicated region
    $region18: #{decoder_forward.1} parent=1 // pred_check
      _
    $region19: #{decoder_forward.1} parent=1 // pred_check_branch
      %28 = sbr.rel (0) target = $region21
    $region20: #{decoder_forward.1} parent=1 // pred_region
      _
    $region21: #{decoder_forward.1} parent=1 // pred_fallthru
      _
    // Predicated region
    $region22: #{decoder_forward.1} parent=1 // pred_check
      _
    $region23: #{decoder_forward.1} parent=1 // pred_check_branch
      %30 = sbr.rel (0) target = $region25
    $region24: #{decoder_forward.1} parent=1 // pred_region
      _
    $region25: #{decoder_forward.1} parent=1 // pred_fallthru
      _
    // Predicated region
    $region26: #{decoder_forward.1} parent=1 // pred_check
      _
    $region27: #{decoder_forward.1} parent=1 // pred_check_branch
      %32 = sbr.rel (0) target = $region29
    $region28: #{decoder_forward.1} parent=1 // pred_region
      _
    $region29: #{decoder_forward.1} parent=1 // pred_fallthru
      _
    // Predicated region
    $region30: #{decoder_forward.1} parent=1 // pred_check
      _
    $region31: #{decoder_forward.1} parent=1 // pred_check_branch
      %34 = sbr.rel (0) target = $region33
    $region32: #{decoder_forward.1} parent=1 // pred_region
      _
    $region33: #{decoder_forward.1} parent=1 // pred_fallthru
      _
    // Predicated region
    $region34: #{decoder_forward.1} parent=1 // pred_check
      _
    $region35: #{decoder_forward.1} parent=1 // pred_check_branch
      %36 = sbr.rel (0) target = $region37
    $region36: #{decoder_forward.1} parent=1 // pred_region
      _
    $region37: #{decoder_forward.1} parent=1 // pred_fallthru
      _
    // Predicated region
    $region38: #{decoder_forward.1} parent=1 // pred_check
      _
    $region39: #{decoder_forward.1} parent=1 // pred_check_branch
      %38 = sbr.rel (0) target = $region41
    $region40: #{decoder_forward.1} parent=1 // pred_region
      _
    $region41: #{decoder_forward.1} parent=1 // pred_fallthru
      _
    // Predicated region
    $region42: #{decoder_forward.1} parent=1 // pred_check
      _
    $region43: #{decoder_forward.1} parent=1 // pred_check_branch
      %40 = sbr.rel (0) target = $region45
    $region44: #{decoder_forward.1} parent=1 // pred_region
      _
    $region45: #{decoder_forward.1} parent=1 // pred_fallthru
      _
    // Predicated region
    $region46: #{decoder_forward.1} parent=1 // pred_check
      _
    $region47: #{decoder_forward.1} parent=1 // pred_check_branch
      %42 = sbr.rel (0) target = $region49
    $region48: #{decoder_forward.1} parent=1 // pred_region
      _
    $region49: #{decoder_forward.1} parent=1 // pred_fallthru
      _
    // Predicated region
    $region50: #{decoder_forward.1} parent=1 // pred_check
      _
    $region51: #{decoder_forward.1} parent=1 // pred_check_branch
      %44 = sbr.rel (0) target = $region53
    $region52: #{decoder_forward.1} parent=1 // pred_region
      _
    $region53: #{decoder_forward.1} parent=1 // pred_fallthru
      _
    %v46 = vld [vmem:[%s0] sm:$0xff]
    %v47 = vpack.c.bf16 %v46, %v46
    %v48 = vld [vmem:[%s1] sm:$0xf]
    %v49 = vld [vmem:[%s1 + $0x4] sm:$0xf]
    %v50 = vld [vmem:[%s2] sm:$0x1]
    %v52 = vperm.slane %v50, 0
    %v56 = vunpack.c.l.b16 %v48
    %v57 = vunpack.c.l.b16 %v49
    %v58 = vpack.c.b16 %v57, %v56
    %vm60 = vcmask 130048
    %v62 = vsel %vm60, %v47, 0
    %64 = vmatpush.bf16.msra.mxu0 0
    %65 = vmatpush.bf16.msra.mxu0 0
    %66 = vmatpush.bf16.msra.mxu0 0
    %67 = vmatpush.bf16.msra.mxu0 0
    %68 = vmatpush.bf16.msra.mxu0 0
    %69 = vmatpush.bf16.msra.mxu0 0
    %70 = vmatpush.bf16.msra.mxu0 0
    %71 = vmatpush.bf16.msra.mxu0 %v58
    %72 = vmatmul.bf16.gmra.mxu0 %v62
    %v73 = vpop.f32.mrf.mxu0
    %v74 = vadd.f32 %v52, %v73
    %v75 = vpop.f32.mrf.mxu0
    %76 = vdwg.mxu0
    %v77 = vmul.f32 %v74, 0.1
    %v78 = vmax.f32 %v74, %v77
    %v79 = vpack.c.bf16 %v78, %v78
    %v80 = vld [vmem:[%s3] sm:$0xf]
    %v81 = vld [vmem:[%s3 + $0x4] sm:$0xf]
    %v82 = vld [vmem:[%s3 + $0x8] sm:$0xf]
    %v83 = vld [vmem:[%s3 + $0xc] sm:$0xf]
    %v84 = vld [vmem:[%s3 + $0x10] sm:$0xf]
    %v85 = vld [vmem:[%s3 + $0x14] sm:$0xf]
    %v86 = vld [vmem:[%s3 + $0x18] sm:$0xf]
    %v87 = vld [vmem:[%s3 + $0x1c] sm:$0xf]
    %v88 = vld [vmem:[%s3 + $0x20] sm:$0xf]
    %v89 = vld [vmem:[%s3 + $0x24] sm:$0xf]
    %v90 = vld [vmem:[%s3 + $0x28] sm:$0xf]
    %v91 = vld [vmem:[%s3 + $0x2c] sm:$0xf]
    %v92 = vld [vmem:[%s3 + $0x30] sm:$0xf]
    %v93 = vld [vmem:[%s3 + $0x34] sm:$0xf]
    %v94 = vld [vmem:[%s3 + $0x38] sm:$0xf]
    %v95 = vld [vmem:[%s3 + $0x3c] sm:$0xf]
    %v96 = vld [vmem:[%s4] sm:$0x1]
    %v98 = vperm.slane %v96, 0
    %v116 = vunpack.c.l.b16 %v80
    %v117 = vunpack.c.l.b16 %v81
    %v118 = vunpack.c.l.b16 %v82
    %v119 = vunpack.c.l.b16 %v83
    %v120 = vunpack.c.l.b16 %v84
    %v121 = vunpack.c.l.b16 %v85
    %v122 = vunpack.c.l.b16 %v86
    %v123 = vunpack.c.l.b16 %v87
    %v124 = vunpack.c.l.b16 %v88
    %v125 = vunpack.c.l.b16 %v89
    %v126 = vunpack.c.l.b16 %v90
    %v127 = vunpack.c.l.b16 %v91
    %v128 = vunpack.c.l.b16 %v92
    %v129 = vunpack.c.l.b16 %v93
    %v130 = vunpack.c.l.b16 %v94
    %v131 = vunpack.c.l.b16 %v95
    %v132 = vpack.c.b16 %v117, %v116
    %v133 = vpack.c.b16 %v119, %v118
    %v134 = vpack.c.b16 %v121, %v120
    %v135 = vpack.c.b16 %v123, %v122
    %v136 = vpack.c.b16 %v125, %v124
    %v137 = vpack.c.b16 %v127, %v126
    %v138 = vpack.c.b16 %v129, %v128
    %v139 = vpack.c.b16 %v131, %v130
    %148 = vmatpush.bf16.msra.mxu0 %v139
    %149 = vmatpush.bf16.msra.mxu0 %v138
    %150 = vmatpush.bf16.msra.mxu0 %v137
    %151 = vmatpush.bf16.msra.mxu0 %v136
    %152 = vmatpush.bf16.msra.mxu0 %v135
    %153 = vmatpush.bf16.msra.mxu0 %v134
    %154 = vmatpush.bf16.msra.mxu0 %v133
    %155 = vmatpush.bf16.msra.mxu0 %v132
    %156 = vmatmul.bf16.gmra.mxu0 %v79
    %v157 = vpop.f32.mrf.mxu0
    %v158 = vadd.f32 %v98, %v157
    %v159 = vpop.f32.mrf.mxu0
    %160 = vdwg.mxu0
    %v161 = vmul.f32 %v158, 0.1
    %v162 = vmax.f32 %v158, %v161
    %v163 = vpack.c.bf16 %v162, %v162
    %v164 = vld [vmem:[%s5] sm:$0xff]
    %v165 = vld [vmem:[%s5 + $0x8] sm:$0xff]
    %v166 = vld [vmem:[%s5 + $0x10] sm:$0xff]
    %v167 = vld [vmem:[%s5 + $0x18] sm:$0xff]
    %v168 = vld [vmem:[%s5 + $0x20] sm:$0xff]
    %v169 = vld [vmem:[%s5 + $0x28] sm:$0xff]
    %v170 = vld [vmem:[%s5 + $0x30] sm:$0xff]
    %v171 = vld [vmem:[%s5 + $0x38] sm:$0xff]
    %v172 = vld [vmem:[%s5 + $0x40] sm:$0xff]
    %v173 = vld [vmem:[%s5 + $0x48] sm:$0xff]
    %v174 = vld [vmem:[%s5 + $0x50] sm:$0xff]
    %v175 = vld [vmem:[%s5 + $0x58] sm:$0xff]
    %v176 = vld [vmem:[%s5 + $0x60] sm:$0xff]
    %v177 = vld [vmem:[%s5 + $0x68] sm:$0xff]
    %v178 = vld [vmem:[%s5 + $0x70] sm:$0xff]
    %v179 = vld [vmem:[%s5 + $0x78] sm:$0xff]
    %v180 = vld [vmem:[%s6] sm:$0x3]
    %v182 = vperm.slane %v180, 0
    %v183 = vperm.slane %v180, 1
    %v202 = vunpack.c.l.b16 %v164
    %v203 = vunpack.c.h.b16 %v164
    %v204 = vunpack.c.l.b16 %v165
    %v205 = vunpack.c.h.b16 %v165
    %v206 = vunpack.c.l.b16 %v166
    %v207 = vunpack.c.h.b16 %v166
    %v208 = vunpack.c.l.b16 %v167
    %v209 = vunpack.c.h.b16 %v167
    %v210 = vunpack.c.l.b16 %v168
    %v211 = vunpack.c.h.b16 %v168
    %v212 = vunpack.c.l.b16 %v169
    %v213 = vunpack.c.h.b16 %v169
    %v214 = vunpack.c.l.b16 %v170
    %v215 = vunpack.c.h.b16 %v170
    %v216 = vunpack.c.l.b16 %v171
    %v217 = vunpack.c.h.b16 %v171
    %v218 = vunpack.c.l.b16 %v172
    %v219 = vunpack.c.h.b16 %v172
    %v220 = vunpack.c.l.b16 %v173
    %v221 = vunpack.c.h.b16 %v173
    %v222 = vunpack.c.l.b16 %v174
    %v223 = vunpack.c.h.b16 %v174
    %v224 = vunpack.c.l.b16 %v175
    %v225 = vunpack.c.h.b16 %v175
    %v226 = vunpack.c.l.b16 %v176
    %v227 = vunpack.c.h.b16 %v176
    %v228 = vunpack.c.l.b16 %v177
    %v229 = vunpack.c.h.b16 %v177
    %v230 = vunpack.c.l.b16 %v178
    %v231 = vunpack.c.h.b16 %v178
    %v232 = vunpack.c.l.b16 %v179
    %v233 = vunpack.c.h.b16 %v179
    %v234 = vpack.c.b16 %v204, %v202
    %v235 = vpack.c.b16 %v205, %v203
    %v236 = vpack.c.b16 %v208, %v206
    %v237 = vpack.c.b16 %v209, %v207
    %v238 = vpack.c.b16 %v212, %v210
    %v239 = vpack.c.b16 %v213, %v211
    %v240 = vpack.c.b16 %v216, %v214
    %v241 = vpack.c.b16 %v217, %v215
    %v242 = vpack.c.b16 %v220, %v218
    %v243 = vpack.c.b16 %v221, %v219
    %v244 = vpack.c.b16 %v224, %v222
    %v245 = vpack.c.b16 %v225, %v223
    %v246 = vpack.c.b16 %v228, %v226
    %v247 = vpack.c.b16 %v229, %v227
    %v248 = vpack.c.b16 %v232, %v230
    %v249 = vpack.c.b16 %v233, %v231
    %266 = vmatpush.bf16.msra.mxu0 %v248
    %267 = vmatpush.bf16.msra.mxu0 %v246
    %268 = vmatpush.bf16.msra.mxu0 %v244
    %269 = vmatpush.bf16.msra.mxu0 %v242
    %270 = vmatpush.bf16.msra.mxu0 %v240
    %271 = vmatpush.bf16.msra.mxu0 %v238
    %272 = vmatpush.bf16.msra.mxu0 %v236
    %273 = vmatpush.bf16.msra.mxu0 %v234
    %274 = vmatmul.bf16.gmra.mxu0 %v163
    %v275 = vpop.f32.mrf.mxu0
    %v276 = vadd.f32 %v182, %v275
    %v277 = vpop.f32.mrf.mxu0
    %278 = vdwg.mxu0
    %279 = vmatpush.bf16.msra.mxu0 %v249
    %280 = vmatpush.bf16.msra.mxu0 %v247
    %281 = vmatpush.bf16.msra.mxu0 %v245
    %282 = vmatpush.bf16.msra.mxu0 %v243
    %283 = vmatpush.bf16.msra.mxu0 %v241
    %284 = vmatpush.bf16.msra.mxu0 %v239
    %285 = vmatpush.bf16.msra.mxu0 %v237
    %286 = vmatpush.bf16.msra.mxu0 %v235
    %287 = vmatmul.bf16.gmra.mxu0 %v163
    %v288 = vpop.f32.mrf.mxu0
    %v289 = vadd.f32 %v183, %v288
    %v290 = vpop.f32.mrf.mxu0
    %291 = vdwg.mxu0
    %v292 = vmul.f32 %v276, 0.1
    %v293 = vmul.f32 %v289, 0.1
    %v294 = vmax.f32 %v276, %v292
    %v295 = vmax.f32 %v289, %v293
    %v296 = vpack.c.bf16 %v294, %v294
    %v297 = vpack.c.bf16 %v295, %v295
    %v298 = vld [vmem:[%s7] sm:$0xf]
    %v299 = vld [vmem:[%s7 + $0x4] sm:$0xf]
    %v300 = vld [vmem:[%s7 + $0x8] sm:$0xf]
    %v301 = vld [vmem:[%s7 + $0xc] sm:$0xf]
    %v302 = vld [vmem:[%s7 + $0x10] sm:$0xf]
    %v303 = vld [vmem:[%s7 + $0x14] sm:$0xf]
    %v304 = vld [vmem:[%s7 + $0x18] sm:$0xf]
    %v305 = vld [vmem:[%s7 + $0x1c] sm:$0xf]
    %v306 = vld [vmem:[%s7 + $0x20] sm:$0xf]
    %v307 = vld [vmem:[%s7 + $0x24] sm:$0xf]
    %v308 = vld [vmem:[%s7 + $0x28] sm:$0xf]
    %v309 = vld [vmem:[%s7 + $0x2c] sm:$0xf]
    %v310 = vld [vmem:[%s7 + $0x30] sm:$0xf]
    %v311 = vld [vmem:[%s7 + $0x34] sm:$0xf]
    %v312 = vld [vmem:[%s7 + $0x38] sm:$0xf]
    %v313 = vld [vmem:[%s7 + $0x3c] sm:$0xf]
    %v314 = vld [vmem:[%s7 + $0x40] sm:$0xf]
    %v315 = vld [vmem:[%s7 + $0x44] sm:$0xf]
    %v316 = vld [vmem:[%s7 + $0x48] sm:$0xf]
    %v317 = vld [vmem:[%s7 + $0x4c] sm:$0xf]
    %v318 = vld [vmem:[%s7 + $0x50] sm:$0xf]
    %v319 = vld [vmem:[%s7 + $0x54] sm:$0xf]
    %v320 = vld [vmem:[%s7 + $0x58] sm:$0xf]
    %v321 = vld [vmem:[%s7 + $0x5c] sm:$0xf]
    %v322 = vld [vmem:[%s7 + $0x60] sm:$0xf]
    %v323 = vld [vmem:[%s7 + $0x64] sm:$0xf]
    %v324 = vld [vmem:[%s7 + $0x68] sm:$0xf]
    %v325 = vld [vmem:[%s7 + $0x6c] sm:$0xf]
    %v326 = vld [vmem:[%s7 + $0x70] sm:$0xf]
    %v327 = vld [vmem:[%s7 + $0x74] sm:$0xf]
    %v328 = vld [vmem:[%s7 + $0x78] sm:$0xf]
    %v329 = vld [vmem:[%s7 + $0x7c] sm:$0xf]
    %v330 = vld [vmem:[%s8] sm:$0x1]
    %v332 = vperm.slane %v330, 0
    %v366 = vunpack.c.l.b16 %v298
    %v367 = vunpack.c.l.b16 %v299
    %v368 = vunpack.c.l.b16 %v300
    %v369 = vunpack.c.l.b16 %v301
    %v370 = vunpack.c.l.b16 %v302
    %v371 = vunpack.c.l.b16 %v303
    %v372 = vunpack.c.l.b16 %v304
    %v373 = vunpack.c.l.b16 %v305
    %v374 = vunpack.c.l.b16 %v306
    %v375 = vunpack.c.l.b16 %v307
    %v376 = vunpack.c.l.b16 %v308
    %v377 = vunpack.c.l.b16 %v309
    %v378 = vunpack.c.l.b16 %v310
    %v379 = vunpack.c.l.b16 %v311
    %v380 = vunpack.c.l.b16 %v312
    %v381 = vunpack.c.l.b16 %v313
    %v382 = vunpack.c.l.b16 %v314
    %v383 = vunpack.c.l.b16 %v315
    %v384 = vunpack.c.l.b16 %v316
    %v385 = vunpack.c.l.b16 %v317
    %v386 = vunpack.c.l.b16 %v318
    %v387 = vunpack.c.l.b16 %v319
    %v388 = vunpack.c.l.b16 %v320
    %v389 = vunpack.c.l.b16 %v321
    %v390 = vunpack.c.l.b16 %v322
    %v391 = vunpack.c.l.b16 %v323
    %v392 = vunpack.c.l.b16 %v324
    %v393 = vunpack.c.l.b16 %v325
    %v394 = vunpack.c.l.b16 %v326
    %v395 = vunpack.c.l.b16 %v327
    %v396 = vunpack.c.l.b16 %v328
    %v397 = vunpack.c.l.b16 %v329
    %v398 = vpack.c.b16 %v367, %v366
    %v399 = vpack.c.b16 %v369, %v368
    %v400 = vpack.c.b16 %v371, %v370
    %v401 = vpack.c.b16 %v373, %v372
    %v402 = vpack.c.b16 %v375, %v374
    %v403 = vpack.c.b16 %v377, %v376
    %v404 = vpack.c.b16 %v379, %v378
    %v405 = vpack.c.b16 %v381, %v380
    %v406 = vpack.c.b16 %v383, %v382
    %v407 = vpack.c.b16 %v385, %v384
    %v408 = vpack.c.b16 %v387, %v386
    %v409 = vpack.c.b16 %v389, %v388
    %v410 = vpack.c.b16 %v391, %v390
    %v411 = vpack.c.b16 %v393, %v392
    %v412 = vpack.c.b16 %v395, %v394
    %v413 = vpack.c.b16 %v397, %v396
    %430 = vmatpush.bf16.msra.mxu0 %v405
    %431 = vmatpush.bf16.msra.mxu0 %v404
    %432 = vmatpush.bf16.msra.mxu0 %v403
    %433 = vmatpush.bf16.msra.mxu0 %v402
    %434 = vmatpush.bf16.msra.mxu0 %v401
    %435 = vmatpush.bf16.msra.mxu0 %v400
    %436 = vmatpush.bf16.msra.mxu0 %v399
    %437 = vmatpush.bf16.msra.mxu0 %v398
    %438 = vmatmul.bf16.gmra.mxu0 %v296
    %v439 = vpop.f32.mrf.mxu0
    %v440 = vadd.f32 %v332, %v439
    %v441 = vpop.f32.mrf.mxu0
    %442 = vdwg.mxu0
    %443 = vmatpush.bf16.msra.mxu0 %v413
    %444 = vmatpush.bf16.msra.mxu0 %v412
    %445 = vmatpush.bf16.msra.mxu0 %v411
    %446 = vmatpush.bf16.msra.mxu0 %v410
    %447 = vmatpush.bf16.msra.mxu0 %v409
    %448 = vmatpush.bf16.msra.mxu0 %v408
    %449 = vmatpush.bf16.msra.mxu0 %v407
    %450 = vmatpush.bf16.msra.mxu0 %v406
    %451 = vmatmul.bf16.gmra.mxu0 %v297
    %v452 = vpop.f32.mrf.mxu0
    %v453 = vadd.f32 %v440, %v452
    %v454 = vpop.f32.mrf.mxu0
    %455 = vdwg.mxu0
    %v456 = vmul.f32 %v453, 0.1
    %v457 = vmax.f32 %v453, %v456
    %v458 = vpack.c.bf16 %v457, %v457
    %v459 = vld [vmem:[%s9] sm:$0xf]
    %v460 = vld [vmem:[%s9 + $0x4] sm:$0xf]
    %v461 = vld [vmem:[%s9 + $0x8] sm:$0xf]
    %v462 = vld [vmem:[%s9 + $0xc] sm:$0xf]
    %v463 = vld [vmem:[%s9 + $0x10] sm:$0xf]
    %v464 = vld [vmem:[%s9 + $0x14] sm:$0xf]
    %v465 = vld [vmem:[%s9 + $0x18] sm:$0xf]
    %v466 = vld [vmem:[%s9 + $0x1c] sm:$0xf]
    %v467 = vld [vmem:[%s9 + $0x20] sm:$0xf]
    %v468 = vld [vmem:[%s9 + $0x24] sm:$0xf]
    %v469 = vld [vmem:[%s9 + $0x28] sm:$0xf]
    %v470 = vld [vmem:[%s9 + $0x2c] sm:$0xf]
    %v471 = vld [vmem:[%s9 + $0x30] sm:$0xf]
    %v472 = vld [vmem:[%s9 + $0x34] sm:$0xf]
    %v473 = vld [vmem:[%s9 + $0x38] sm:$0xf]
    %v474 = vld [vmem:[%s9 + $0x3c] sm:$0xf]
    %v475 = vld [vmem:[%s10] sm:$0x1]
    %v477 = vperm.slane %v475, 0
    %v495 = vunpack.c.l.b16 %v459
    %v496 = vunpack.c.l.b16 %v460
    %v497 = vunpack.c.l.b16 %v461
    %v498 = vunpack.c.l.b16 %v462
    %v499 = vunpack.c.l.b16 %v463
    %v500 = vunpack.c.l.b16 %v464
    %v501 = vunpack.c.l.b16 %v465
    %v502 = vunpack.c.l.b16 %v466
    %v503 = vunpack.c.l.b16 %v467
    %v504 = vunpack.c.l.b16 %v468
    %v505 = vunpack.c.l.b16 %v469
    %v506 = vunpack.c.l.b16 %v470
    %v507 = vunpack.c.l.b16 %v471
    %v508 = vunpack.c.l.b16 %v472
    %v509 = vunpack.c.l.b16 %v473
    %v510 = vunpack.c.l.b16 %v474
    %v511 = vpack.c.b16 %v496, %v495
    %v512 = vpack.c.b16 %v498, %v497
    %v513 = vpack.c.b16 %v500, %v499
    %v514 = vpack.c.b16 %v502, %v501
    %v515 = vpack.c.b16 %v504, %v503
    %v516 = vpack.c.b16 %v506, %v505
    %v517 = vpack.c.b16 %v508, %v507
    %v518 = vpack.c.b16 %v510, %v509
    %527 = vmatpush.bf16.msra.mxu0 %v518
    %528 = vmatpush.bf16.msra.mxu0 %v517
    %529 = vmatpush.bf16.msra.mxu0 %v516
    %530 = vmatpush.bf16.msra.mxu0 %v515
    %531 = vmatpush.bf16.msra.mxu0 %v514
    %532 = vmatpush.bf16.msra.mxu0 %v513
    %533 = vmatpush.bf16.msra.mxu0 %v512
    %534 = vmatpush.bf16.msra.mxu0 %v511
    %535 = vmatmul.bf16.gmra.mxu0 %v458
    %v536 = vpop.f32.mrf.mxu0
    %v537 = vadd.f32 %v477, %v536
    %v538 = vpop.f32.mrf.mxu0
    %539 = vdwg.mxu0
    %v540 = vmul.f32 %v537, 0.1
    %v541 = vmax.f32 %v537, %v540
    %v542 = vpack.c.bf16 %v541, %v541
    %v543 = vld [vmem:[%s11] sm:$0xf]
    %v544 = vld [vmem:[%s11 + $0x4] sm:$0xf]
    %v545 = vld [vmem:[%s11 + $0x8] sm:$0xf]
    %v546 = vld [vmem:[%s11 + $0xc] sm:$0xf]
    %v547 = vld [vmem:[%s11 + $0x10] sm:$0xf]
    %v548 = vld [vmem:[%s11 + $0x14] sm:$0xf]
    %v549 = vld [vmem:[%s11 + $0x18] sm:$0xf]
    %v550 = vld [vmem:[%s11 + $0x1c] sm:$0xf]
    %v551 = vld [vmem:[%s11 + $0x20] sm:$0xf]
    %v552 = vld [vmem:[%s11 + $0x24] sm:$0xf]
    %v553 = vld [vmem:[%s11 + $0x28] sm:$0xf]
    %v554 = vld [vmem:[%s11 + $0x2c] sm:$0xf]
    %v555 = vld [vmem:[%s11 + $0x30] sm:$0xf]
    %v556 = vld [vmem:[%s11 + $0x34] sm:$0xf]
    %v557 = vld [vmem:[%s11 + $0x38] sm:$0xf]
    %v558 = vld [vmem:[%s11 + $0x3c] sm:$0xf]
    %v559 = vld [vmem:[%s12] sm:$0x1]
    %v561 = vperm.slane %v559, 0
    %v579 = vunpack.c.l.b16 %v543
    %v580 = vunpack.c.l.b16 %v544
    %v581 = vunpack.c.l.b16 %v545
    %v582 = vunpack.c.l.b16 %v546
    %v583 = vunpack.c.l.b16 %v547
    %v584 = vunpack.c.l.b16 %v548
    %v585 = vunpack.c.l.b16 %v549
    %v586 = vunpack.c.l.b16 %v550
    %v587 = vunpack.c.l.b16 %v551
    %v588 = vunpack.c.l.b16 %v552
    %v589 = vunpack.c.l.b16 %v553
    %v590 = vunpack.c.l.b16 %v554
    %v591 = vunpack.c.l.b16 %v555
    %v592 = vunpack.c.l.b16 %v556
    %v593 = vunpack.c.l.b16 %v557
    %v594 = vunpack.c.l.b16 %v558
    %v595 = vpack.c.b16 %v580, %v579
    %v596 = vpack.c.b16 %v582, %v581
    %v597 = vpack.c.b16 %v584, %v583
    %v598 = vpack.c.b16 %v586, %v585
    %v599 = vpack.c.b16 %v588, %v587
    %v600 = vpack.c.b16 %v590, %v589
    %v601 = vpack.c.b16 %v592, %v591
    %v602 = vpack.c.b16 %v594, %v593
    %611 = vmatpush.bf16.msra.mxu0 %v602
    %612 = vmatpush.bf16.msra.mxu0 %v601
    %613 = vmatpush.bf16.msra.mxu0 %v600
    %614 = vmatpush.bf16.msra.mxu0 %v599
    %615 = vmatpush.bf16.msra.mxu0 %v598
    %616 = vmatpush.bf16.msra.mxu0 %v597
    %617 = vmatpush.bf16.msra.mxu0 %v596
    %618 = vmatpush.bf16.msra.mxu0 %v595
    %619 = vmatmul.bf16.gmra.mxu0 %v542
    %v620 = vpop.f32.mrf.mxu0
    %v621 = vadd.f32 %v561, %v620
    %v622 = vpop.f32.mrf.mxu0
    %623 = vdwg.mxu0
    %vm624 = vcmask 293888
    %625 = vst.msk [vmem:[#allocation2] sm:$0xff] %vm624, %v621
    // Predicated region
    $region54: #{decoder_forward.1} parent=1 // pred_check
      _
    $region55: #{decoder_forward.1} parent=1 // pred_check_branch
      %627 = sbr.rel (0) target = $region57
    $region56: #{decoder_forward.1} parent=1 // pred_region
      %629 = vsyncadd [#allocation3], 0
      %s631 = sshll.u32 [#allocation2], 4
      %s632 = int_to_ptr.vmem [resolvable:$true] %s631
      %s633 = sshll.u32 %s13, 4
      %s634 = int_to_ptr.hbm [resolvable:$true] %s633
      %636 = dma.vmem_to_hbm [thread:$0]  %s632, 128, %s634, [#allocation3]
    $region57: #{decoder_forward.1} parent=1 // pred_fallthru
      _
    // Predicated region
    $region58: #{decoder_forward.1} parent=1 // pred_check
      _
    $region59: #{decoder_forward.1} parent=1 // pred_check_branch
      %638 = sbr.rel (0) target = $region61
    $region60: #{decoder_forward.1} parent=1 // pred_region
      %640 = dma.done [#allocation3], 128
    $region61: #{decoder_forward.1} parent=1 // pred_fallthru
      _
    %641 = vsyncpa [#allocation3], 1

</llo_original>
